<compile_context>
chip_gen: v7x
topology: tpu7x:2x2x1
jax: 0.10.0
libtpu: 0.0.40
codegen_flags: <defaults>
</compile_context>

<pallas_src>
import jax
import jax.numpy as jnp
from jax.experimental import pallas as pl
from jax.experimental.pallas import tpu as pltpu


def _round_up(x, m):
    return ((x + m - 1) // m) * m


# ---------------------------------------------------------------------------
# Kernel: one batch tile of the fused actor+critic MLP.
# ---------------------------------------------------------------------------
def fused_actor_critic_kernel(obs_ref, w1_ref, b1_ref, w2_ref, b2_ref,
                              w3_ref, b3_ref, out_ref):
    x = obs_ref[...]

    # Biases are pre-broadcast to 8 identical sublanes -> unmasked loads;
    # row 0 is used (f32, broadcast over the batch tile in the add).
    b1 = b1_ref[...][0:1, :]
    b2 = b2_ref[...][0:1, :]
    b3 = b3_ref[...][0:1, :]

    # layer 1: shared-input concat (actor hidden | critic hidden)
    h = jnp.dot(x, w1_ref[...], preferred_element_type=jnp.float32) + b1
    h = jnp.maximum(h, 0.0).astype(w2_ref.dtype)      # ReLU in f32, MXU dtype in

    # layer 2: block-diagonal (actor block | critic block)
    # TODO(synk): for 2*hidden_dim >> 128 the off-diagonal zero blocks double
    # MXU work; split into two matmuls on the sliced halves once compute-bound.
    h = jnp.dot(h, w2_ref[...], preferred_element_type=jnp.float32) + b2
    h = jnp.maximum(h, 0.0).astype(w3_ref.dtype)

    # layer 3: fused head -> [logits | value | zero-pad], lane-dense store
    out = jnp.dot(h, w3_ref[...], preferred_element_type=jnp.float32) + b3
    out_ref[...] = out.astype(out_ref.dtype)


# ---------------------------------------------------------------------------
# Parameter packing: fuse + zero-pad the six Linear layers into three weights.
# ---------------------------------------------------------------------------
def pack_params(params, obs_dim, action_dim, hidden_dim,
                compute_dtype=jnp.bfloat16):
    H, A = hidden_dim, action_dim
    Hp = _round_up(2 * H, 128)       # fused hidden width (actor | critic)
    Op = _round_up(A + 1, 128)       # fused head width (logits | value | pad)
    # NOTE: on v6e/v7x, rounding Hp/Op to multiples of 256 better fills the
    # 256x256 MXU once hidden_dim is large; at small H it only adds zero FLOPs.

    # layer 1: true (unpadded) obs feature dim as the contraction dim.
    w1 = jnp.zeros((obs_dim, Hp), jnp.float32)
    w1 = w1.at[:, :H].set(params["aw1"])
    w1 = w1.at[:, H:2 * H].set(params["cw1"])
    b1 = jnp.zeros((1, Hp), jnp.float32)
    b1 = b1.at[:, :H].set(params["ab1"])
    b1 = b1.at[:, H:2 * H].set(params["cb1"])

    # layer 2: block-diagonal.
    w2 = jnp.zeros((Hp, Hp), jnp.float32)
    w2 = w2.at[:H, :H].set(params["aw2"])
    w2 = w2.at[H:2 * H, H:2 * H].set(params["cw2"])
    b2 = jnp.zeros((1, Hp), jnp.float32)
    b2 = b2.at[:, :H].set(params["ab2"])
    b2 = b2.at[:, H:2 * H].set(params["cb2"])

    # layer 3: fused head (actor logits in cols 0..A-1, critic value in col A).
    w3 = jnp.zeros((Hp, Op), jnp.float32)
    w3 = w3.at[:H, :A].set(params["aw3"])
    w3 = w3.at[H:2 * H, A:A + 1].set(params["cw3"])
    b3 = jnp.zeros((1, Op), jnp.float32)
    b3 = b3.at[:, :A].set(params["ab3"])
    b3 = b3.at[:, A:A + 1].set(params["cb3"])

    # Pre-broadcast biases to 8 sublanes (unmasked vreg loads); keep them f32.
    b1, b2, b3 = (jnp.tile(b, (8, 1)) for b in (b1, b2, b3))

    return dict(
        w1=w1.astype(compute_dtype), b1=b1,
        w2=w2.astype(compute_dtype), b2=b2,
        w3=w3.astype(compute_dtype), b3=b3,
        obs_dim=obs_dim, action_dim=A, hidden_dim=H,
        Hp=Hp, Op=Op, compute_dtype=compute_dtype,
    )


# ---------------------------------------------------------------------------
# Batch tile choice.
# ---------------------------------------------------------------------------
def _choose_batch_tile(B):
    if B <= 1024:
        return _round_up(B, 8)           # one tile: latency path for small B
    # Prefer the largest tile with <=10% pad waste and an EVEN tile count so
    # the "parallel" batch axis shards evenly across v7x's two TensorCores.
    for tb in (1024, 512, 256):
        bp = _round_up(B, tb)
        if (bp - B) * 10 <= B and (bp // tb) % 2 == 0:
            return tb
    for tb in (1024, 512, 256):          # fall back: ignore parity
        if (_round_up(B, tb) - B) * 10 <= B:
            return tb
    return 256


# ---------------------------------------------------------------------------
# Wrapper: (batch-)pad obs, launch batch-tiled kernel, slice logits/value.
# ---------------------------------------------------------------------------
def actor_critic_forward(obs, packed):
    B, obs_dim = obs.shape
    assert obs_dim == packed["obs_dim"]
    A = packed["action_dim"]
    Op = packed["Op"]
    cdt = packed["compute_dtype"]

    TB = _choose_batch_tile(B)
    Bp = _round_up(B, TB)

    # Only the batch axis is padded; the feature axis keeps its true width.
    obs_in = obs.astype(cdt)
    if Bp != B:
        obs_in = jnp.zeros((Bp, obs_dim), cdt).at[:B, :].set(obs_in)

    w1, b1 = packed["w1"], packed["b1"]
    w2, b2 = packed["w2"], packed["b2"]
    w3, b3 = packed["w3"], packed["b3"]

    # Resident operands (constant index_map -> fetched once, stay in VMEM).
    # Single-buffer them only when they are large enough for double-buffering
    # to matter (protects v7x's 32 MiB scoped / 64 MiB physical VMEM).
    resident_bytes = sum(a.nbytes for a in (w1, b1, w2, b2, w3, b3))
    single_buffer = resident_bytes > (4 << 20)

    def resident(arr):
        if single_buffer:
            return pl.BlockSpec(arr.shape, lambda i: (0, 0),
                                pipeline_mode=pl.Buffered(1))
        return pl.BlockSpec(arr.shape, lambda i: (0, 0))

    out = pl.pallas_call(
        fused_actor_critic_kernel,
        out_shape=jax.ShapeDtypeStruct((Bp, Op), cdt),
        grid=(Bp // TB,),
        in_specs=[
            pl.BlockSpec((TB, obs_dim), lambda i: (i, 0)),   # obs: batch-tiled
            resident(w1), resident(b1),
            resident(w2), resident(b2),
            resident(w3), resident(b3),
        ],
        out_specs=pl.BlockSpec((TB, Op), lambda i: (i, 0)),
        compiler_params=pltpu.CompilerParams(
            dimension_semantics=("parallel",),               # megacore on v7x
            vmem_limit_bytes=32 * 1024 * 1024,               # > v5e's 16 MiB default
        ),
    )(obs_in, w1, b1, w2, b2, w3, b3)

    # One slice of the padded slab, then split logits / value (tiny arrays).
    # TODO(synk): if downstream needs full-precision values in the bf16 path,
    # emit the critic value as a separate small f32 output instead.
    head = out[:B, :A + 1].astype(jnp.float32)
    logits = head[:, :A]
    values = head[:, A]
    return logits, values


# ---------------------------------------------------------------------------
# Synthetic init (stand-in for orthogonal init; zero biases) + JAX reference.
# ---------------------------------------------------------------------------
def init_params(key, obs_dim, action_dim, hidden_dim):
    ks = jax.random.split(key, 6)

    def lin(k, n_in, n_out):
        w = jax.random.normal(k, (n_in, n_out), dtype=jnp.float32) / jnp.sqrt(n_in)
        b = jnp.zeros((1, n_out), dtype=jnp.float32)
        return w, b

    aw1, ab1 = lin(ks[0], obs_dim, hidden_dim)
    aw2, ab2 = lin(ks[1], hidden_dim, hidden_dim)
    aw3, ab3 = lin(ks[2], hidden_dim, action_dim)
    cw1, cb1 = lin(ks[3], obs_dim, hidden_dim)
    cw2, cb2 = lin(ks[4], hidden_dim, hidden_dim)
    cw3, cb3 = lin(ks[5], hidden_dim, 1)

    return dict(aw1=aw1, ab1=ab1, aw2=aw2, ab2=ab2, aw3=aw3, ab3=ab3,
                cw1=cw1, cb1=cb1, cw2=cw2, cb2=cb2, cw3=cw3, cb3=cb3)


def reference_forward(obs, p):
    h = jnp.maximum(obs @ p["aw1"] + p["ab1"], 0.0)
    h = jnp.maximum(h @ p["aw2"] + p["ab2"], 0.0)
    logits = h @ p["aw3"] + p["ab3"]
    g = jnp.maximum(obs @ p["cw1"] + p["cb1"], 0.0)
    g = jnp.maximum(g @ p["cw2"] + p["cb2"], 0.0)
    values = (g @ p["cw3"] + p["cb3"])[:, 0]
    return logits, values


if __name__ == "__main__":
    # Small shapes consistent with ActorCriticConfig(obs_dim, action_dim, hidden_dim)
    B, OBS_DIM, ACTION_DIM, HIDDEN_DIM = 8, 16, 4, 32

    key = jax.random.PRNGKey(0)
    k_obs, k_params, k_big = jax.random.split(key, 3)
    obs = jax.random.normal(k_obs, (B, OBS_DIM), dtype=jnp.float32)
    params = init_params(k_params, OBS_DIM, ACTION_DIM, HIDDEN_DIM)

    ref_logits, ref_values = reference_forward(obs, params)

    # f32 compute path: exact-semantics check against the pure-JAX reference.
    packed_f32 = pack_params(params, OBS_DIM, ACTION_DIM, HIDDEN_DIM, jnp.float32)
    logits, values = actor_critic_forward(obs, packed_f32)
    jax.block_until_ready((logits, values))
    assert logits.shape == (B, ACTION_DIM)
    assert values.shape == (B,)
    assert jnp.allclose(logits, ref_logits, atol=1e-4, rtol=1e-4)
    assert jnp.allclose(values, ref_values, atol=1e-4, rtol=1e-4)

    # bf16 (default) path: bf16 weights/obs/output, f32 accumulation.
    packed_bf16 = pack_params(params, OBS_DIM, ACTION_DIM, HIDDEN_DIM)
    logits_bf, values_bf = actor_critic_forward(obs, packed_bf16)
    jax.block_until_ready((logits_bf, values_bf))
    assert jnp.allclose(logits_bf, ref_logits, atol=1e-1, rtol=1e-1)
    assert jnp.allclose(values_bf, ref_values, atol=1e-1, rtol=1e-1)

    # Large-batch path: exercises multi-tile grid + batch padding (TB=1024, 2 tiles).
    Bb = 2000
    obs_big = jax.random.normal(k_big, (Bb, OBS_DIM), dtype=jnp.float32)
    ref_logits_b, ref_values_b = reference_forward(obs_big, params)
    logits_b, values_b = actor_critic_forward(obs_big, packed_bf16)
    jax.block_until_ready((logits_b, values_b))
    assert logits_b.shape == (Bb, ACTION_DIM)
    assert values_b.shape == (Bb,)
    assert jnp.allclose(logits_b, ref_logits_b, atol=1e-1, rtol=1e-1)
    assert jnp.allclose(values_b, ref_values_b, atol=1e-1, rtol=1e-1)

    # TODO(synk): get_action sampling (Categorical), GAE recursion, compute_loss,
    # and the imagination rollout loop are host-side control flow / RNG driven and
    # are not part of the nn.Module forward hot path, so they are not kernelized.

    print("KERNEL_OK")
</pallas_src>

<mosaic_0001>
module attributes {stable_mosaic.version = 11 : i64} {
  func.func @fused_actor_critic_kernel(%arg0: i32, %arg1: memref<8x16xf32, #tpu.memory_space<vmem>>, %arg2: memref<16x128xf32, #tpu.memory_space<vmem>>, %arg3: memref<8x128xf32, #tpu.memory_space<vmem>>, %arg4: memref<128x128xf32, #tpu.memory_space<vmem>>, %arg5: memref<8x128xf32, #tpu.memory_space<vmem>>, %arg6: memref<128x128xf32, #tpu.memory_space<vmem>>, %arg7: memref<8x128xf32, #tpu.memory_space<vmem>>, %arg8: memref<8x128xf32, #tpu.memory_space<vmem>>) attributes {dimension_semantics = [#tpu.dimension_semantics<parallel>], iteration_bounds = array<i64: 1>, scalar_prefetch = 0 : i64, scratch_operands = 0 : i64, tpu.core_type = #tpu.core_type<tc>, window_params = [{transform_indices = @transform_0, window_bounds = array<i64: 8, 16>}, {pipeline_mode = #tpu.pipeline_mode<synchronous>, transform_indices = @transform_1, window_bounds = array<i64: 16, 128>}, {pipeline_mode = #tpu.pipeline_mode<synchronous>, transform_indices = @transform_2, window_bounds = array<i64: 8, 128>}, {pipeline_mode = #tpu.pipeline_mode<synchronous>, transform_indices = @transform_3, window_bounds = array<i64: 128, 128>}, {pipeline_mode = #tpu.pipeline_mode<synchronous>, transform_indices = @transform_4, window_bounds = array<i64: 8, 128>}, {pipeline_mode = #tpu.pipeline_mode<synchronous>, transform_indices = @transform_5, window_bounds = array<i64: 128, 128>}, {pipeline_mode = #tpu.pipeline_mode<synchronous>, transform_indices = @transform_6, window_bounds = array<i64: 8, 128>}, {transform_indices = @transform_7, window_bounds = array<i64: 8, 128>}]} {
    %c0 = arith.constant 0 : index
    %c0_0 = arith.constant 0 : index
    %0 = vector.load %arg1[%c0, %c0_0] : memref<8x16xf32, #tpu.memory_space<vmem>>, vector<8x16xf32>
    %c0_1 = arith.constant 0 : index
    %c0_2 = arith.constant 0 : index
    %1 = vector.load %arg3[%c0_1, %c0_2] : memref<8x128xf32, #tpu.memory_space<vmem>>, vector<8x128xf32>
    %2 = vector.extract_strided_slice %1 {offsets = [0, 0], sizes = [1, 128], strides = [1, 1]} : vector<8x128xf32> to vector<1x128xf32>
    %c0_3 = arith.constant 0 : index
    %c0_4 = arith.constant 0 : index
    %3 = vector.load %arg5[%c0_3, %c0_4] : memref<8x128xf32, #tpu.memory_space<vmem>>, vector<8x128xf32>
    %4 = vector.extract_strided_slice %3 {offsets = [0, 0], sizes = [1, 128], strides = [1, 1]} : vector<8x128xf32> to vector<1x128xf32>
    %c0_5 = arith.constant 0 : index
    %c0_6 = arith.constant 0 : index
    %5 = vector.load %arg7[%c0_5, %c0_6] : memref<8x128xf32, #tpu.memory_space<vmem>>, vector<8x128xf32>
    %6 = vector.extract_strided_slice %5 {offsets = [0, 0], sizes = [1, 128], strides = [1, 1]} : vector<8x128xf32> to vector<1x128xf32>
    %c0_7 = arith.constant 0 : index
    %c0_8 = arith.constant 0 : index
    %7 = vector.load %arg2[%c0_7, %c0_8] : memref<16x128xf32, #tpu.memory_space<vmem>>, vector<16x128xf32>
    %cst = arith.constant dense<0.000000e+00> : vector<8x128xf32>
    %8 = tpu.matmul %0, %7, %cst {dimension_numbers = #tpu.dot_dimension_numbers<[1], [0], [0], [1], [0, 0, 1, 1], [], []>} : vector<8x16xf32>, vector<16x128xf32>, vector<8x128xf32> -> vector<8x128xf32>
    %9 = vector.broadcast %2 : vector<1x128xf32> to vector<8x128xf32>
    %10 = arith.addf %8, %9 : vector<8x128xf32>
    %cst_9 = arith.constant 0.000000e+00 : f32
    %11 = vector.broadcast %cst_9 : f32 to vector<8x128xf32>
    %12 = arith.maximumf %10, %11 : vector<8x128xf32>
    %c0_10 = arith.constant 0 : index
    %c0_11 = arith.constant 0 : index
    %13 = vector.load %arg4[%c0_10, %c0_11] : memref<128x128xf32, #tpu.memory_space<vmem>>, vector<128x128xf32>
    %cst_12 = arith.constant dense<0.000000e+00> : vector<8x128xf32>
    %14 = tpu.matmul %12, %13, %cst_12 {dimension_numbers = #tpu.dot_dimension_numbers<[1], [0], [0], [1], [0, 0, 1, 1], [], []>} : vector<8x128xf32>, vector<128x128xf32>, vector<8x128xf32> -> vector<8x128xf32>
    %15 = vector.broadcast %4 : vector<1x128xf32> to vector<8x128xf32>
    %16 = arith.addf %14, %15 : vector<8x128xf32>
    %cst_13 = arith.constant 0.000000e+00 : f32
    %17 = vector.broadcast %cst_13 : f32 to vector<8x128xf32>
    %18 = arith.maximumf %16, %17 : vector<8x128xf32>
    %c0_14 = arith.constant 0 : index
    %c0_15 = arith.constant 0 : index
    %19 = vector.load %arg6[%c0_14, %c0_15] : memref<128x128xf32, #tpu.memory_space<vmem>>, vector<128x128xf32>
    %cst_16 = arith.constant dense<0.000000e+00> : vector<8x128xf32>
    %20 = tpu.matmul %18, %19, %cst_16 {dimension_numbers = #tpu.dot_dimension_numbers<[1], [0], [0], [1], [0, 0, 1, 1], [], []>} : vector<8x128xf32>, vector<128x128xf32>, vector<8x128xf32> -> vector<8x128xf32>
    %21 = vector.broadcast %6 : vector<1x128xf32> to vector<8x128xf32>
    %22 = arith.addf %20, %21 : vector<8x128xf32>
    %c0_17 = arith.constant 0 : index
    %c0_18 = arith.constant 0 : index
    %23 = vector.load %arg8[%c0_17, %c0_18] : memref<8x128xf32, #tpu.memory_space<vmem>>, vector<8x128xf32>
    tpu.vector_store %arg8[%c0_17, %c0_18], %22 {strides = array<i32>} : memref<8x128xf32, #tpu.memory_space<vmem>>, vector<8x128xf32>,
    return
  }
  func.func @transform_0(%arg0: i32) -> (i32, i32) {
    %c0_i32 = arith.constant 0 : i32
    %c0_i32_0 = arith.constant 0 : i32
    return %arg0, %c0_i32 : i32, i32
  }
  func.func @transform_1(%arg0: i32) -> (i32, i32) {
    %c0_i32 = arith.constant 0 : i32
    %c0_i32_0 = arith.constant 0 : i32
    %c0_i32_1 = arith.constant 0 : i32
    return %c0_i32, %c0_i32_0 : i32, i32
  }
  func.func @transform_2(%arg0: i32) -> (i32, i32) {
    %c0_i32 = arith.constant 0 : i32
    %c0_i32_0 = arith.constant 0 : i32
    %c0_i32_1 = arith.constant 0 : i32
    return %c0_i32, %c0_i32_0 : i32, i32
  }
  func.func @transform_3(%arg0: i32) -> (i32, i32) {
    %c0_i32 = arith.constant 0 : i32
    %c0_i32_0 = arith.constant 0 : i32
    %c0_i32_1 = arith.constant 0 : i32
    return %c0_i32, %c0_i32_0 : i32, i32
  }
  func.func @transform_4(%arg0: i32) -> (i32, i32) {
    %c0_i32 = arith.constant 0 : i32
    %c0_i32_0 = arith.constant 0 : i32
    %c0_i32_1 = arith.constant 0 : i32
    return %c0_i32, %c0_i32_0 : i32, i32
  }
  func.func @transform_5(%arg0: i32) -> (i32, i32) {
    %c0_i32 = arith.constant 0 : i32
    %c0_i32_0 = arith.constant 0 : i32
    %c0_i32_1 = arith.constant 0 : i32
    return %c0_i32, %c0_i32_0 : i32, i32
  }
  func.func @transform_6(%arg0: i32) -> (i32, i32) {
    %c0_i32 = arith.constant 0 : i32
    %c0_i32_0 = arith.constant 0 : i32
    %c0_i32_1 = arith.constant 0 : i32
    return %c0_i32, %c0_i32_0 : i32, i32
  }
  func.func @transform_7(%arg0: i32) -> (i32, i32) {
    %c0_i32 = arith.constant 0 : i32
    %c0_i32_0 = arith.constant 0 : i32
    return %arg0, %c0_i32 : i32, i32
  }
}

</mosaic_0001>

<llo_original>
// kernel: tpu_custom_call.1
$region0: #{tpu_custom_call.1}
  #allocation0 [shape = 'u32[]', space=smem, size = 0x4, offset = 0x4, fixed_abs, tag = 'smem constant byte address 0x4 - core index']
  #allocation1 [shape = 'u32[144,128]{1,0:T(1,128)}', space=vmem, size = 0x12000, scoped, tag = 'internal scratch']
  %s0 = inlined_call_operand.hbm [shape: f32[8,16], index: 0, kind: input, shape index: {}]
  %s1 = inlined_call_operand.hbm [shape: f32[16,128], index: 1, kind: input, shape index: {}]
  %s2 = inlined_call_operand.hbm [shape: f32[8,128], index: 2, kind: input, shape index: {}]
  %s3 = inlined_call_operand.hbm [shape: f32[128,128], index: 3, kind: input, shape index: {}]
  %s4 = inlined_call_operand.vmem [shape: f32[8,128], index: 4, kind: input, shape index: {}]
  %s5 = inlined_call_operand.hbm [shape: f32[128,128], index: 5, kind: input, shape index: {}]
  %s6 = inlined_call_operand.vmem [shape: f32[8,128], index: 6, kind: input, shape index: {}]
  %s7 = inlined_call_operand.hbm [shape: f32[8,128], index: 7, kind: output, shape index: {}]
  %s8 = sld [smem:[#allocation0]]
  $region58: #{tpu_custom_call.1} parent=0
    _
  %s10 = ssub.s32 1, %s8
  %s11 = scalar_select 0, %s10, %s8
  $region1: #{tpu_custom_call.1} parent=0
    #allocation2 [shape = 'u8[4096]{0}', space=vmem, size = 0x1000, scoped, tag = 'input window, operand 0, single buffered']
    #allocation3 [shape = 's32[1]{0}', space=sflag, size = 0x4, scoped, tag = 'scoped memory for tpu_custom_call.1']
    #allocation4 [shape = 's32[1]{0}', space=sflag, size = 0x4, scoped, tag = 'scoped memory for tpu_custom_call.1']
    #allocation5 [shape = 'u8[8192]{0}', space=vmem, size = 0x2000, scoped, tag = 'input window, operand 1, single buffered']
    #allocation6 [shape = 's32[1]{0}', space=sflag, size = 0x4, scoped, tag = 'scoped memory for tpu_custom_call.1']
    #allocation7 [shape = 'u8[4096]{0}', space=vmem, size = 0x1000, scoped, tag = 'input window, operand 2, single buffered']
    #allocation8 [shape = 'u8[65536]{0}', space=vmem, size = 0x10000, scoped, tag = 'input window, operand 3, single buffered']
    #allocation9 [shape = 's32[1]{0}', space=sflag, size = 0x4, scoped, tag = 'scoped memory for tpu_custom_call.1']
    #allocation10 [shape = 'u8[65536]{0}', space=vmem, size = 0x10000, scoped, tag = 'input window, operand 5, single buffered']
    #allocation11 [shape = 'u8[4096]{0}', space=vmem, size = 0x1000, scoped, tag = 'output window, operand 0, single buffered']
    %12 = vsyncpa [#allocation3], 0
    %13 = vsyncpa [#allocation6], 0
    %14 = vsyncpa [#allocation9], 0
    %15 = vsyncpa [#allocation4], 0
    // Predicated region
    $region2: #{tpu_custom_call.1} parent=1 // pred_check
      _
    $region3: #{tpu_custom_call.1} parent=1 // pred_check_branch
      %17 = sbr.rel (0) target = $region5
    $region4: #{tpu_custom_call.1} parent=1 // pred_region
      %s19 = ssub.s32 128, 128
      %20 = vsyncadd [#allocation3], %s19
      %s22 = sshll.u32 [#allocation2], 4
      %s23 = int_to_ptr.vmem [resolvable:$true] %s22
      %25 = dma.hbm_to_vmem [thread:$0]  %s0, 128, %s23, [#allocation3]
    $region5: #{tpu_custom_call.1} parent=1 // pred_fallthru
      _
    // Predicated region
    $region6: #{tpu_custom_call.1} parent=1 // pred_check
      _
    $region7: #{tpu_custom_call.1} parent=1 // pred_check_branch
      %27 = sbr.rel (0) target = $region9
    $region8: #{tpu_custom_call.1} parent=1 // pred_region
      %s29 = ssub.s32 256, 256
      %30 = vsyncadd [#allocation6], %s29
      %s31 = sshll.u32 [#allocation5], 4
      %s32 = int_to_ptr.vmem [resolvable:$true] %s31
      %37 = dma.hbm_to_vmem [thread:$0]  %s1, 256, %s32, [#allocation6], 128, 128, 8
    $region9: #{tpu_custom_call.1} parent=1 // pred_fallthru
      _
    // Predicated region
    $region10: #{tpu_custom_call.1} parent=1 // pred_check
      _
    $region11: #{tpu_custom_call.1} parent=1 // pred_check_branch
      %39 = sbr.rel (0) target = $region13
    $region12: #{tpu_custom_call.1} parent=1 // pred_region
      %s41 = ssub.s32 128, 128
      %42 = vsyncadd [#allocation6], %s41
      %s44 = sshll.u32 [#allocation7], 4
      %s45 = int_to_ptr.vmem [resolvable:$true] %s44
      %47 = dma.hbm_to_vmem [thread:$0]  %s2, 128, %s45, [#allocation6]
    $region13: #{tpu_custom_call.1} parent=1 // pred_fallthru
      _
    // Predicated region
    $region14: #{tpu_custom_call.1} parent=1 // pred_check
      _
    $region15: #{tpu_custom_call.1} parent=1 // pred_check_branch
      %49 = sbr.rel (0) target = $region17
    $region16: #{tpu_custom_call.1} parent=1 // pred_region
      %s51 = ssub.s32 2048, 2048
      %52 = vsyncadd [#allocation9], %s51
      %s53 = sshll.u32 [#allocation8], 4
      %s54 = int_to_ptr.vmem [resolvable:$true] %s53
      %59 = dma.hbm_to_vmem [thread:$0]  %s3, 2048, %s54, [#allocation9], 128, 128, 8
    $region17: #{tpu_custom_call.1} parent=1 // pred_fallthru
      _
    // Predicated region
    $region18: #{tpu_custom_call.1} parent=1 // pred_check
      _
    $region19: #{tpu_custom_call.1} parent=1 // pred_check_branch
      %61 = sbr.rel (0) target = $region21
    $region20: #{tpu_custom_call.1} parent=1 // pred_region
      _
    $region21: #{tpu_custom_call.1} parent=1 // pred_fallthru
      _
    // Predicated region
    $region22: #{tpu_custom_call.1} parent=1 // pred_check
      _
    $region23: #{tpu_custom_call.1} parent=1 // pred_check_branch
      %63 = sbr.rel (0) target = $region25
    $region24: #{tpu_custom_call.1} parent=1 // pred_region
      %s65 = ssub.s32 2048, 2048
      %66 = vsyncadd [#allocation9], %s65
      %s67 = sshll.u32 [#allocation10], 4
      %s68 = int_to_ptr.vmem [resolvable:$true] %s67
      %73 = dma.hbm_to_vmem [thread:$0]  %s5, 2048, %s68, [#allocation9], 128, 128, 8
    $region25: #{tpu_custom_call.1} parent=1 // pred_fallthru
      _
    // Predicated region
    $region26: #{tpu_custom_call.1} parent=1 // pred_check
      _
    $region27: #{tpu_custom_call.1} parent=1 // pred_check_branch
      %75 = sbr.rel (0) target = $region29
    $region28: #{tpu_custom_call.1} parent=1 // pred_region
      _
    $region29: #{tpu_custom_call.1} parent=1 // pred_fallthru
      _
    // Predicated region
    $region30: #{tpu_custom_call.1} parent=1 // pred_check
      _
    $region31: #{tpu_custom_call.1} parent=1 // pred_check_branch
      %77 = sbr.rel (0) target = $region33
    $region32: #{tpu_custom_call.1} parent=1 // pred_region
      %78 = dma.done [#allocation3], 128
    $region33: #{tpu_custom_call.1} parent=1 // pred_fallthru
      _
    // Predicated region
    $region34: #{tpu_custom_call.1} parent=1 // pred_check
      _
    $region35: #{tpu_custom_call.1} parent=1 // pred_check_branch
      %80 = sbr.rel (0) target = $region37
    $region36: #{tpu_custom_call.1} parent=1 // pred_region
      %81 = dma.done [#allocation6], 256
    $region37: #{tpu_custom_call.1} parent=1 // pred_fallthru
      _
    // Predicated region
    $region38: #{tpu_custom_call.1} parent=1 // pred_check
      _
    $region39: #{tpu_custom_call.1} parent=1 // pred_check_branch
      %83 = sbr.rel (0) target = $region41
    $region40: #{tpu_custom_call.1} parent=1 // pred_region
      %84 = dma.done [#allocation6], 128
    $region41: #{tpu_custom_call.1} parent=1 // pred_fallthru
      _
    // Predicated region
    $region42: #{tpu_custom_call.1} parent=1 // pred_check
      _
    $region43: #{tpu_custom_call.1} parent=1 // pred_check_branch
      %86 = sbr.rel (0) target = $region45
    $region44: #{tpu_custom_call.1} parent=1 // pred_region
      %87 = dma.done [#allocation9], 2048
    $region45: #{tpu_custom_call.1} parent=1 // pred_fallthru
      _
    // Predicated region
    $region46: #{tpu_custom_call.1} parent=1 // pred_check
      _
    $region47: #{tpu_custom_call.1} parent=1 // pred_check_branch
      %89 = sbr.rel (0) target = $region49
    $region48: #{tpu_custom_call.1} parent=1 // pred_region
      %90 = dma.done [#allocation9], 2048
    $region49: #{tpu_custom_call.1} parent=1 // pred_fallthru
      _
    %v91 = vld [vmem:[#allocation2] sm:$0xff]
    %v92 = vld [vmem:[#allocation7] sm:$0xff]
    %v93 = vld [vmem:[%s4] sm:$0xff]
    %v94 = vld [vmem:[%s6] sm:$0xff]
    %v95 = vld [vmem:[#allocation5] sm:$0xff]
    %v96 = vld [vmem:[#allocation5 + $0x8] sm:$0xff]
    %v97 = vlaneseq
    %v98 = vshrl.u32 %v97, 7
    %v99 = vsub.s32 0, %v98
    %v100 = vrot.slane %v92, %v99
    %vm101 = vcmask 130048
    %v103 = vsel %vm101, %v91, 0
    %105 = vmatprep.subr.mxu0 0.0
    %106 = vmatpush1.msra.mxu0 %v95
    %107 = vmatprep.subr.mxu0 0.0
    %108 = vmatpush1.msra.mxu0 %v96
    %109 = vmatprep.subr.mxu0 0.0
    %110 = vmatpush1.msra.mxu0 0.0
    %111 = vmatprep.subr.mxu0 0.0
    %112 = vmatpush1.msra.mxu0 0.0
    %113 = vmatprep.subr.mxu0 0.0
    %114 = vmatpush1.msra.mxu0 0.0
    %115 = vmatprep.subr.mxu0 0.0
    %116 = vmatpush1.msra.mxu0 0.0
    %117 = vmatprep.subr.mxu0 0.0
    %118 = vmatpush1.msra.mxu0 0.0
    %119 = vmatprep.subr.mxu0 0.0
    %120 = vmatpush1.msra.mxu0 0.0
    %121 = vmatprep.subr.mxu0 0.0
    %122 = vmatpush1.msra.mxu0 0.0
    %123 = vmatprep.subr.mxu0 0.0
    %124 = vmatpush1.msra.mxu0 0.0
    %125 = vmatprep.subr.mxu0 0.0
    %126 = vmatpush1.msra.mxu0 0.0
    %127 = vmatprep.subr.mxu0 0.0
    %128 = vmatpush1.msra.mxu0 0.0
    %129 = vmatprep.subr.mxu0 0.0
    %130 = vmatpush1.msra.mxu0 0.0
    %131 = vmatprep.subr.mxu0 0.0
    %132 = vmatpush1.msra.mxu0 0.0
    %133 = vmatprep.subr.mxu0 0.0
    %134 = vmatpush1.msra.mxu0 0.0
    %135 = vmatprep.subr.mxu0 0.0
    %136 = vmatpush1.msra.mxu0 0.0
    %137 = vmatprep.subr.mxu0 0.0
    %138 = vmatpush1.msra.mxu0 0.0
    %139 = vmatprep.subr.mxu0 0.0
    %140 = vmatpush1.msra.mxu0 0.0
    %141 = vmatprep.subr.mxu0 0.0
    %142 = vmatpush1.msra.mxu0 0.0
    %143 = vmatprep.subr.mxu0 0.0
    %144 = vmatpush1.msra.mxu0 0.0
    %145 = vmatprep.subr.mxu0 0.0
    %146 = vmatpush1.msra.mxu0 0.0
    %147 = vmatprep.subr.mxu0 0.0
    %148 = vmatpush1.msra.mxu0 0.0
    %149 = vmatprep.subr.mxu0 0.0
    %150 = vmatpush1.msra.mxu0 0.0
    %151 = vmatprep.subr.mxu0 0.0
    %152 = vmatpush1.msra.mxu0 0.0
    %153 = vmatprep.subr.mxu0 0.0
    %154 = vmatpush1.msra.mxu0 0.0
    %155 = vmatprep.subr.mxu0 0.0
    %156 = vmatpush1.msra.mxu0 0.0
    %157 = vmatprep.subr.mxu0 0.0
    %158 = vmatpush1.msra.mxu0 0.0
    %159 = vmatprep.subr.mxu0 0.0
    %160 = vmatpush1.msra.mxu0 0.0
    %161 = vmatprep.subr.mxu0 0.0
    %162 = vmatpush1.msra.mxu0 0.0
    %163 = vmatprep.subr.mxu0 0.0
    %164 = vmatpush1.msra.mxu0 0.0
    %165 = vmatprep.subr.mxu0 0.0
    %166 = vmatpush1.msra.mxu0 0.0
    %167 = vmatprep.subr.mxu0 0.0
    %168 = vmatpush1.msra.mxu0 0.0
    %169 = vmatprep.mubr.f32.mxu0 0.0
    %170 = vmatmul.mubr.f32.gmra.mrb[0].mxu0 %v103
    %v171 = vpop.f32.mrb[0].mxu0
    %v172 = vadd.f32 %v100, %v171
    %v173 = vpop.f32.mrb[0].mxu0
    %174 = vdwg.mxu0
    %v175 = vmax.f32 %v172, 0.0
    %v176 = vld [vmem:[#allocation8] sm:$0xff]
    %v177 = vld [vmem:[#allocation8 + $0x8] sm:$0xff]
    %v178 = vld [vmem:[#allocation8 + $0x10] sm:$0xff]
    %v179 = vld [vmem:[#allocation8 + $0x18] sm:$0xff]
    %v180 = vld [vmem:[#allocation8 + $0x20] sm:$0xff]
    %v181 = vld [vmem:[#allocation8 + $0x28] sm:$0xff]
    %v182 = vld [vmem:[#allocation8 + $0x30] sm:$0xff]
    %v183 = vld [vmem:[#allocation8 + $0x38] sm:$0xff]
    %v184 = vld [vmem:[#allocation8 + $0x40] sm:$0xff]
    %v185 = vld [vmem:[#allocation8 + $0x48] sm:$0xff]
    %v186 = vld [vmem:[#allocation8 + $0x50] sm:$0xff]
    %v187 = vld [vmem:[#allocation8 + $0x58] sm:$0xff]
    %v188 = vld [vmem:[#allocation8 + $0x60] sm:$0xff]
    %v189 = vld [vmem:[#allocation8 + $0x68] sm:$0xff]
    %v190 = vld [vmem:[#allocation8 + $0x70] sm:$0xff]
    %v191 = vld [vmem:[#allocation8 + $0x78] sm:$0xff]
    %v192 = vlaneseq
    %v193 = vshrl.u32 %v192, 7
    %v194 = vsub.s32 0, %v193
    %v195 = vrot.slane %v93, %v194
    %196 = vmatprep.subr.mxu0 0.0
    %197 = vmatpush1.msra.mxu0 %v176
    %198 = vmatprep.subr.mxu0 0.0
    %199 = vmatpush1.msra.mxu0 %v177
    %200 = vmatprep.subr.mxu0 0.0
    %201 = vmatpush1.msra.mxu0 %v178
    %202 = vmatprep.subr.mxu0 0.0
    %203 = vmatpush1.msra.mxu0 %v179
    %204 = vmatprep.subr.mxu0 0.0
    %205 = vmatpush1.msra.mxu0 %v180
    %206 = vmatprep.subr.mxu0 0.0
    %207 = vmatpush1.msra.mxu0 %v181
    %208 = vmatprep.subr.mxu0 0.0
    %209 = vmatpush1.msra.mxu0 %v182
    %210 = vmatprep.subr.mxu0 0.0
    %211 = vmatpush1.msra.mxu0 %v183
    %212 = vmatprep.subr.mxu0 0.0
    %213 = vmatpush1.msra.mxu0 %v184
    %214 = vmatprep.subr.mxu0 0.0
    %215 = vmatpush1.msra.mxu0 %v185
    %216 = vmatprep.subr.mxu0 0.0
    %217 = vmatpush1.msra.mxu0 %v186
    %218 = vmatprep.subr.mxu0 0.0
    %219 = vmatpush1.msra.mxu0 %v187
    %220 = vmatprep.subr.mxu0 0.0
    %221 = vmatpush1.msra.mxu0 %v188
    %222 = vmatprep.subr.mxu0 0.0
    %223 = vmatpush1.msra.mxu0 %v189
    %224 = vmatprep.subr.mxu0 0.0
    %225 = vmatpush1.msra.mxu0 %v190
    %226 = vmatprep.subr.mxu0 0.0
    %227 = vmatpush1.msra.mxu0 %v191
    %228 = vmatprep.subr.mxu0 0.0
    %229 = vmatpush1.msra.mxu0 0.0
    %230 = vmatprep.subr.mxu0 0.0
    %231 = vmatpush1.msra.mxu0 0.0
    %232 = vmatprep.subr.mxu0 0.0
    %233 = vmatpush1.msra.mxu0 0.0
    %234 = vmatprep.subr.mxu0 0.0
    %235 = vmatpush1.msra.mxu0 0.0
    %236 = vmatprep.subr.mxu0 0.0
    %237 = vmatpush1.msra.mxu0 0.0
    %238 = vmatprep.subr.mxu0 0.0
    %239 = vmatpush1.msra.mxu0 0.0
    %240 = vmatprep.subr.mxu0 0.0
    %241 = vmatpush1.msra.mxu0 0.0
    %242 = vmatprep.subr.mxu0 0.0
    %243 = vmatpush1.msra.mxu0 0.0
    %244 = vmatprep.subr.mxu0 0.0
    %245 = vmatpush1.msra.mxu0 0.0
    %246 = vmatprep.subr.mxu0 0.0
    %247 = vmatpush1.msra.mxu0 0.0
    %248 = vmatprep.subr.mxu0 0.0
    %249 = vmatpush1.msra.mxu0 0.0
    %250 = vmatprep.subr.mxu0 0.0
    %251 = vmatpush1.msra.mxu0 0.0
    %252 = vmatprep.subr.mxu0 0.0
    %253 = vmatpush1.msra.mxu0 0.0
    %254 = vmatprep.subr.mxu0 0.0
    %255 = vmatpush1.msra.mxu0 0.0
    %256 = vmatprep.subr.mxu0 0.0
    %257 = vmatpush1.msra.mxu0 0.0
    %258 = vmatprep.subr.mxu0 0.0
    %259 = vmatpush1.msra.mxu0 0.0
    %260 = vmatprep.mubr.f32.mxu0 0.0
    %261 = vmatmul.mubr.f32.gmra.mrb[0].mxu0 %v175
    %v262 = vpop.f32.mrb[0].mxu0
    %v263 = vadd.f32 %v195, %v262
    %v264 = vpop.f32.mrb[0].mxu0
    %265 = vdwg.mxu0
    %v266 = vmax.f32 %v263, 0.0
    %v267 = vld [vmem:[#allocation10] sm:$0xff]
    %v268 = vld [vmem:[#allocation10 + $0x8] sm:$0xff]
    %v269 = vld [vmem:[#allocation10 + $0x10] sm:$0xff]
    %v270 = vld [vmem:[#allocation10 + $0x18] sm:$0xff]
    %v271 = vld [vmem:[#allocation10 + $0x20] sm:$0xff]
    %v272 = vld [vmem:[#allocation10 + $0x28] sm:$0xff]
    %v273 = vld [vmem:[#allocation10 + $0x30] sm:$0xff]
    %v274 = vld [vmem:[#allocation10 + $0x38] sm:$0xff]
    %v275 = vld [vmem:[#allocation10 + $0x40] sm:$0xff]
    %v276 = vld [vmem:[#allocation10 + $0x48] sm:$0xff]
    %v277 = vld [vmem:[#allocation10 + $0x50] sm:$0xff]
    %v278 = vld [vmem:[#allocation10 + $0x58] sm:$0xff]
    %v279 = vld [vmem:[#allocation10 + $0x60] sm:$0xff]
    %v280 = vld [vmem:[#allocation10 + $0x68] sm:$0xff]
    %v281 = vld [vmem:[#allocation10 + $0x70] sm:$0xff]
    %v282 = vld [vmem:[#allocation10 + $0x78] sm:$0xff]
    %v283 = vlaneseq
    %v284 = vshrl.u32 %v283, 7
    %v285 = vsub.s32 0, %v284
    %v286 = vrot.slane %v94, %v285
    %287 = vmatprep.subr.mxu0 0.0
    %288 = vmatpush1.msra.mxu0 %v267
    %289 = vmatprep.subr.mxu0 0.0
    %290 = vmatpush1.msra.mxu0 %v268
    %291 = vmatprep.subr.mxu0 0.0
    %292 = vmatpush1.msra.mxu0 %v269
    %293 = vmatprep.subr.mxu0 0.0
    %294 = vmatpush1.msra.mxu0 %v270
    %295 = vmatprep.subr.mxu0 0.0
    %296 = vmatpush1.msra.mxu0 %v271
    %297 = vmatprep.subr.mxu0 0.0
    %298 = vmatpush1.msra.mxu0 %v272
    %299 = vmatprep.subr.mxu0 0.0
    %300 = vmatpush1.msra.mxu0 %v273
    %301 = vmatprep.subr.mxu0 0.0
    %302 = vmatpush1.msra.mxu0 %v274
    %303 = vmatprep.subr.mxu0 0.0
    %304 = vmatpush1.msra.mxu0 %v275
    %305 = vmatprep.subr.mxu0 0.0
    %306 = vmatpush1.msra.mxu0 %v276
    %307 = vmatprep.subr.mxu0 0.0
    %308 = vmatpush1.msra.mxu0 %v277
    %309 = vmatprep.subr.mxu0 0.0
    %310 = vmatpush1.msra.mxu0 %v278
    %311 = vmatprep.subr.mxu0 0.0
    %312 = vmatpush1.msra.mxu0 %v279
    %313 = vmatprep.subr.mxu0 0.0
    %314 = vmatpush1.msra.mxu0 %v280
    %315 = vmatprep.subr.mxu0 0.0
    %316 = vmatpush1.msra.mxu0 %v281
    %317 = vmatprep.subr.mxu0 0.0
    %318 = vmatpush1.msra.mxu0 %v282
    %319 = vmatprep.subr.mxu0 0.0
    %320 = vmatpush1.msra.mxu0 0.0
    %321 = vmatprep.subr.mxu0 0.0
    %322 = vmatpush1.msra.mxu0 0.0
    %323 = vmatprep.subr.mxu0 0.0
    %324 = vmatpush1.msra.mxu0 0.0
    %325 = vmatprep.subr.mxu0 0.0
    %326 = vmatpush1.msra.mxu0 0.0
    %327 = vmatprep.subr.mxu0 0.0
    %328 = vmatpush1.msra.mxu0 0.0
    %329 = vmatprep.subr.mxu0 0.0
    %330 = vmatpush1.msra.mxu0 0.0
    %331 = vmatprep.subr.mxu0 0.0
    %332 = vmatpush1.msra.mxu0 0.0
    %333 = vmatprep.subr.mxu0 0.0
    %334 = vmatpush1.msra.mxu0 0.0
    %335 = vmatprep.subr.mxu0 0.0
    %336 = vmatpush1.msra.mxu0 0.0
    %337 = vmatprep.subr.mxu0 0.0
    %338 = vmatpush1.msra.mxu0 0.0
    %339 = vmatprep.subr.mxu0 0.0
    %340 = vmatpush1.msra.mxu0 0.0
    %341 = vmatprep.subr.mxu0 0.0
    %342 = vmatpush1.msra.mxu0 0.0
    %343 = vmatprep.subr.mxu0 0.0
    %344 = vmatpush1.msra.mxu0 0.0
    %345 = vmatprep.subr.mxu0 0.0
    %346 = vmatpush1.msra.mxu0 0.0
    %347 = vmatprep.subr.mxu0 0.0
    %348 = vmatpush1.msra.mxu0 0.0
    %349 = vmatprep.subr.mxu0 0.0
    %350 = vmatpush1.msra.mxu0 0.0
    %351 = vmatprep.mubr.f32.mxu0 0.0
    %352 = vmatmul.mubr.f32.gmra.mrb[0].mxu0 %v266
    %v353 = vpop.f32.mrb[0].mxu0
    %v354 = vadd.f32 %v286, %v353
    %v355 = vpop.f32.mrb[0].mxu0
    %356 = vdwg.mxu0
    %357 = vst [vmem:[#allocation11] sm:$0xff] %v354
    // Predicated region
    $region50: #{tpu_custom_call.1} parent=1 // pred_check
      _
    $region51: #{tpu_custom_call.1} parent=1 // pred_check_branch
      %359 = sbr.rel (0) target = $region53
    $region52: #{tpu_custom_call.1} parent=1 // pred_region
      %s361 = ssub.s32 128, 128
      %362 = vsyncadd [#allocation4], %s361
      %s364 = sshll.u32 [#allocation11], 4
      %s365 = int_to_ptr.vmem [resolvable:$true] %s364
      %367 = dma.vmem_to_hbm [thread:$0]  %s365, 128, %s7, [#allocation4]
    $region53: #{tpu_custom_call.1} parent=1 // pred_fallthru
      _
    // Predicated region
    $region54: #{tpu_custom_call.1} parent=1 // pred_check
      _
    $region55: #{tpu_custom_call.1} parent=1 // pred_check_branch
      %369 = sbr.rel (0) target = $region57
    $region56: #{tpu_custom_call.1} parent=1 // pred_region
      %370 = dma.done [#allocation4], 128
    $region57: #{tpu_custom_call.1} parent=1 // pred_fallthru
      _
    %371 = vsyncpa [#allocation3], 1
    %372 = vsyncpa [#allocation6], 1
    %373 = vsyncpa [#allocation9], 1
    %374 = vsyncpa [#allocation4], 1

</llo_original>
